<compile_context>
chip_gen: v5e
topology: v5e:2x2
jax: 0.10.0
libtpu: 0.0.40
codegen_flags: <defaults>
</compile_context>

<pallas_src>
import math

import jax
import jax.numpy as jnp
from jax.experimental import pallas as pl
from jax.experimental.pallas import tpu as pltpu


def _token_embedding_kernel(x_ref, w_ref, o_ref):
    # x_ref: (BB, L, C) f32   w_ref: (3, C, TD) bf16   o_ref: (BB, L, TD) f32/bf16
    BB, L, _ = x_ref.shape
    w_prev = w_ref[0]   # applied to x[(l-1) % L]
    w_mid = w_ref[1]    # applied to x[l]
    w_next = w_ref[2]   # applied to x[(l+1) % L]

    # Static unroll over the batch block (BB <= 8): 3 small dots per batch,
    # MXU is nowhere near binding — the kernel is output-stream bound.
    for b in range(BB):
        xb = x_ref[b]                                              # (L, C) f32
        # Circular shifts built from the resident full-L tile (f32 concat on
        # the sublane axis, then cast to bf16 for the MXU).
        x_prev = jnp.concatenate([xb[L - 1:L, :], xb[:L - 1, :]], axis=0)
        x_next = jnp.concatenate([xb[1:, :], xb[0:1, :]], axis=0)

        xm = xb.astype(jnp.bfloat16)
        xp = x_prev.astype(jnp.bfloat16)
        xn = x_next.astype(jnp.bfloat16)

        acc = jnp.dot(xm, w_mid, preferred_element_type=jnp.float32)
        acc += jnp.dot(xp, w_prev, preferred_element_type=jnp.float32)
        acc += jnp.dot(xn, w_next, preferred_element_type=jnp.float32)
        o_ref[b] = acc.astype(o_ref.dtype)


def _vmem_budget():
    """(per-step double-buffered budget, vmem_limit_bytes), generation-aware."""
    try:
        cap = pltpu.get_tpu_info().vmem_capacity_bytes
    except Exception:
        cap = 64 * 1024 * 1024  # assume the tightest case (v7x per-TC)
    if cap >= 100 * 1024 * 1024:          # v5e / v6e: 128 MiB physical VMEM
        return 48 * 1024 * 1024, 64 * 1024 * 1024
    return 24 * 1024 * 1024, 48 * 1024 * 1024   # v7x: 64 MiB per TensorCore


def _pick_tiles(B, L, C, Dp, out_itemsize, budget_bytes, bb_cap=8):
    """Pick (BB, TD): BB divides B (<= bb_cap), TD divides Dp (multiple of 128),
    such that the double-buffered per-step footprint fits the budget."""

    def footprint(bb, td):
        lhs = bb * L * C * 4                   # x block (f32)
        wgt = 3 * C * td * 2                   # weight block (bf16)
        out = bb * L * td * out_itemsize       # output block
        return 2 * (lhs + wgt + out)           # pipeline double-buffers each

    td_candidates = sorted(
        {Dp // n for n in range(1, Dp // 128 + 1)
         if Dp % n == 0 and (Dp // n) % 128 == 0},
        reverse=True,
    )
    td = next((t for t in td_candidates if footprint(1, t) <= budget_bytes),
              td_candidates[-1])
    # TODO(synk): extremely long sequences (L*128*4*2 > budget) would need a
    # halo-tiled L axis; current design keeps full L resident per step.

    bb = 1
    for cand in range(min(B, bb_cap), 0, -1):
        if B % cand == 0 and footprint(cand, td) <= budget_bytes:
            bb = cand
            break
    return bb, td, footprint(bb, td)


def token_embedding(x, weight, *, out_dtype=jnp.float32):
    """x: (B, L, C_in) float32, weight: (d_model, C_in, 3) (PyTorch Conv1d layout)."""
    B, L, C = x.shape
    D = weight.shape[0]
    assert weight.shape == (D, C, 3)

    # weight (D, C, 3) -> (3, C, D); w[k] multiplies x[(l-1+k) % L].
    w = jnp.transpose(weight, (2, 1, 0))

    # Lane-dense output: pad d_model up to a multiple of 128 with zero columns.
    Dp = ((D + 127) // 128) * 128
    if Dp != D:
        w = jnp.pad(w, ((0, 0), (0, 0), (0, Dp - D)))
    w = w.astype(jnp.bfloat16)

    budget, base_limit = _vmem_budget()
    out_itemsize = jnp.dtype(out_dtype).itemsize
    BB, TD, fp = _pick_tiles(B, L, C, Dp, out_itemsize, budget)
    grid = (B // BB, Dp // TD)

    out = pl.pallas_call(
        _token_embedding_kernel,
        out_shape=jax.ShapeDtypeStruct((B, L, Dp), out_dtype),
        grid_spec=pltpu.PrefetchScalarGridSpec(
            num_scalar_prefetch=0,
            grid=grid,
            in_specs=[
                # x block index constant along d -> fetched once per batch block.
                pl.BlockSpec((BB, L, C), lambda b, d: (b, 0, 0)),
                # weight block index constant along b -> not re-fetched per batch.
                pl.BlockSpec((3, C, TD), lambda b, d: (0, 0, d)),
            ],
            out_specs=pl.BlockSpec((BB, L, TD), lambda b, d: (b, 0, d)),
        ),
        compiler_params=pltpu.CompilerParams(
            dimension_semantics=("parallel", "parallel"),
            vmem_limit_bytes=max(base_limit, fp + (2 << 20)),
        ),
    )(x, w)

    if Dp != D:
        # No-op when d_model is already 128-aligned; otherwise consider fusing
        # the consumer on the padded output instead of slicing here.
        out = out[..., :D]
    return out


def _kaiming_normal_conv1d(key, d_model, c_in, ksize=3, a=0.01):
    # kaiming_normal_(mode='fan_in', nonlinearity='leaky_relu')-style init
    fan_in = c_in * ksize
    gain = math.sqrt(2.0 / (1.0 + a * a))
    std = gain / math.sqrt(fan_in)
    return std * jax.random.normal(key, (d_model, c_in, ksize), dtype=jnp.float32)


if __name__ == "__main__":
    B, L, C_IN, D_MODEL = 2, 8, 4, 32

    key = jax.random.PRNGKey(0)
    kx, kw = jax.random.split(key)
    x = jax.random.normal(kx, (B, L, C_IN), dtype=jnp.float32)
    weight = _kaiming_normal_conv1d(kw, D_MODEL, C_IN)

    out = jax.block_until_ready(token_embedding(x, weight))

    # Pure-JAX reference of the circular conv on the same bf16-rounded operands
    # (the kernel feeds the MXU bf16 inputs with f32 accumulation).
    xb = x.astype(jnp.bfloat16).astype(jnp.float32)
    wt = jnp.transpose(weight, (2, 1, 0)).astype(jnp.bfloat16).astype(jnp.float32)
    ref = (
        jnp.einsum("blc,cd->bld", jnp.roll(xb, 1, axis=1), wt[0])
        + jnp.einsum("blc,cd->bld", xb, wt[1])
        + jnp.einsum("blc,cd->bld", jnp.roll(xb, -1, axis=1), wt[2])
    )
    assert out.shape == (B, L, D_MODEL)
    assert jnp.allclose(out, ref, atol=2e-3, rtol=2e-3)

    print("KERNEL_OK")
</pallas_src>

<mosaic_0001>
module attributes {stable_mosaic.version = 11 : i64} {
  func.func @_token_embedding_kernel(%arg0: i32, %arg1: i32, %arg2: memref<2x8x4xf32, #tpu.memory_space<vmem>>, %arg3: memref<3x4x128xbf16, #tpu.memory_space<vmem>>, %arg4: memref<2x8x128xf32, #tpu.memory_space<vmem>>) attributes {dimension_semantics = [#tpu.dimension_semantics<parallel>, #tpu.dimension_semantics<parallel>], iteration_bounds = array<i64: 1, 1>, scalar_prefetch = 0 : i64, scratch_operands = 0 : i64, tpu.core_type = #tpu.core_type<tc>, window_params = [{transform_indices = @transform_0, window_bounds = array<i64: 2, 8, 4>}, {transform_indices = @transform_1, window_bounds = array<i64: 3, 4, 128>}, {transform_indices = @transform_2, window_bounds = array<i64: 2, 8, 128>}]} {
    %c0 = arith.constant 0 : index
    %c0_0 = arith.constant 0 : index
    %c0_1 = arith.constant 0 : index
    %0 = vector.load %arg3[%c0, %c0_0, %c0_1] : memref<3x4x128xbf16, #tpu.memory_space<vmem>>, vector<1x4x128xbf16>
    %1 = vector.shape_cast %0 : vector<1x4x128xbf16> to vector<4x128xbf16>
    %c1 = arith.constant 1 : index
    %c0_2 = arith.constant 0 : index
    %c0_3 = arith.constant 0 : index
    %2 = vector.load %arg3[%c1, %c0_2, %c0_3] : memref<3x4x128xbf16, #tpu.memory_space<vmem>>, vector<1x4x128xbf16>
    %3 = vector.shape_cast %2 : vector<1x4x128xbf16> to vector<4x128xbf16>
    %c2 = arith.constant 2 : index
    %c0_4 = arith.constant 0 : index
    %c0_5 = arith.constant 0 : index
    %4 = vector.load %arg3[%c2, %c0_4, %c0_5] : memref<3x4x128xbf16, #tpu.memory_space<vmem>>, vector<1x4x128xbf16>
    %5 = vector.shape_cast %4 : vector<1x4x128xbf16> to vector<4x128xbf16>
    %c0_6 = arith.constant 0 : index
    %c0_7 = arith.constant 0 : index
    %c0_8 = arith.constant 0 : index
    %6 = vector.load %arg2[%c0_6, %c0_7, %c0_8] : memref<2x8x4xf32, #tpu.memory_space<vmem>>, vector<1x8x4xf32>
    %7 = vector.shape_cast %6 : vector<1x8x4xf32> to vector<8x4xf32>
    %8 = vector.extract_strided_slice %7 {offsets = [7, 0], sizes = [1, 4], strides = [1, 1]} : vector<8x4xf32> to vector<1x4xf32>
    %9 = vector.extract_strided_slice %7 {offsets = [0, 0], sizes = [7, 4], strides = [1, 1]} : vector<8x4xf32> to vector<7x4xf32>
    %10 = tpu.concatenate %8, %9 in 0 : vector<1x4xf32>, vector<7x4xf32> -> vector<8x4xf32>
    %11 = vector.extract_strided_slice %7 {offsets = [1, 0], sizes = [7, 4], strides = [1, 1]} : vector<8x4xf32> to vector<7x4xf32>
    %12 = vector.extract_strided_slice %7 {offsets = [0, 0], sizes = [1, 4], strides = [1, 1]} : vector<8x4xf32> to vector<1x4xf32>
    %13 = tpu.concatenate %11, %12 in 0 : vector<7x4xf32>, vector<1x4xf32> -> vector<8x4xf32>
    %14 = arith.truncf %7 : vector<8x4xf32> to vector<8x4xbf16>
    %15 = arith.truncf %10 : vector<8x4xf32> to vector<8x4xbf16>
    %16 = arith.truncf %13 : vector<8x4xf32> to vector<8x4xbf16>
    %cst = arith.constant dense<0.000000e+00> : vector<8x128xf32>
    %17 = tpu.matmul %14, %3, %cst {dimension_numbers = #tpu.dot_dimension_numbers<[1], [0], [0], [1], [0, 0, 1, 1], [], []>} : vector<8x4xbf16>, vector<4x128xbf16>, vector<8x128xf32> -> vector<8x128xf32>
    %cst_9 = arith.constant dense<0.000000e+00> : vector<8x128xf32>
    %18 = tpu.matmul %15, %1, %cst_9 {dimension_numbers = #tpu.dot_dimension_numbers<[1], [0], [0], [1], [0, 0, 1, 1], [], []>} : vector<8x4xbf16>, vector<4x128xbf16>, vector<8x128xf32> -> vector<8x128xf32>
    %19 = arith.addf %17, %18 : vector<8x128xf32>
    %cst_10 = arith.constant dense<0.000000e+00> : vector<8x128xf32>
    %20 = tpu.matmul %16, %5, %cst_10 {dimension_numbers = #tpu.dot_dimension_numbers<[1], [0], [0], [1], [0, 0, 1, 1], [], []>} : vector<8x4xbf16>, vector<4x128xbf16>, vector<8x128xf32> -> vector<8x128xf32>
    %21 = arith.addf %19, %20 : vector<8x128xf32>
    %c0_11 = arith.constant 0 : index
    %c0_12 = arith.constant 0 : index
    %c0_13 = arith.constant 0 : index
    %22 = vector.load %arg4[%c0_11, %c0_12, %c0_13] : memref<2x8x128xf32, #tpu.memory_space<vmem>>, vector<1x8x128xf32>
    %23 = vector.shape_cast %22 : vector<1x8x128xf32> to vector<8x128xf32>
    %24 = vector.shape_cast %21 : vector<8x128xf32> to vector<1x8x128xf32>
    tpu.vector_store %arg4[%c0_11, %c0_12, %c0_13], %24 {strides = array<i32>} : memref<2x8x128xf32, #tpu.memory_space<vmem>>, vector<1x8x128xf32>,
    %c1_14 = arith.constant 1 : index
    %c0_15 = arith.constant 0 : index
    %c0_16 = arith.constant 0 : index
    %25 = vector.load %arg2[%c1_14, %c0_15, %c0_16] : memref<2x8x4xf32, #tpu.memory_space<vmem>>, vector<1x8x4xf32>
    %26 = vector.shape_cast %25 : vector<1x8x4xf32> to vector<8x4xf32>
    %27 = vector.extract_strided_slice %26 {offsets = [7, 0], sizes = [1, 4], strides = [1, 1]} : vector<8x4xf32> to vector<1x4xf32>
    %28 = vector.extract_strided_slice %26 {offsets = [0, 0], sizes = [7, 4], strides = [1, 1]} : vector<8x4xf32> to vector<7x4xf32>
    %29 = tpu.concatenate %27, %28 in 0 : vector<1x4xf32>, vector<7x4xf32> -> vector<8x4xf32>
    %30 = vector.extract_strided_slice %26 {offsets = [1, 0], sizes = [7, 4], strides = [1, 1]} : vector<8x4xf32> to vector<7x4xf32>
    %31 = vector.extract_strided_slice %26 {offsets = [0, 0], sizes = [1, 4], strides = [1, 1]} : vector<8x4xf32> to vector<1x4xf32>
    %32 = tpu.concatenate %30, %31 in 0 : vector<7x4xf32>, vector<1x4xf32> -> vector<8x4xf32>
    %33 = arith.truncf %26 : vector<8x4xf32> to vector<8x4xbf16>
    %34 = arith.truncf %29 : vector<8x4xf32> to vector<8x4xbf16>
    %35 = arith.truncf %32 : vector<8x4xf32> to vector<8x4xbf16>
    %cst_17 = arith.constant dense<0.000000e+00> : vector<8x128xf32>
    %36 = tpu.matmul %33, %3, %cst_17 {dimension_numbers = #tpu.dot_dimension_numbers<[1], [0], [0], [1], [0, 0, 1, 1], [], []>} : vector<8x4xbf16>, vector<4x128xbf16>, vector<8x128xf32> -> vector<8x128xf32>
    %cst_18 = arith.constant dense<0.000000e+00> : vector<8x128xf32>
    %37 = tpu.matmul %34, %1, %cst_18 {dimension_numbers = #tpu.dot_dimension_numbers<[1], [0], [0], [1], [0, 0, 1, 1], [], []>} : vector<8x4xbf16>, vector<4x128xbf16>, vector<8x128xf32> -> vector<8x128xf32>
    %38 = arith.addf %36, %37 : vector<8x128xf32>
    %cst_19 = arith.constant dense<0.000000e+00> : vector<8x128xf32>
    %39 = tpu.matmul %35, %5, %cst_19 {dimension_numbers = #tpu.dot_dimension_numbers<[1], [0], [0], [1], [0, 0, 1, 1], [], []>} : vector<8x4xbf16>, vector<4x128xbf16>, vector<8x128xf32> -> vector<8x128xf32>
    %40 = arith.addf %38, %39 : vector<8x128xf32>
    %c1_20 = arith.constant 1 : index
    %c0_21 = arith.constant 0 : index
    %c0_22 = arith.constant 0 : index
    %41 = vector.load %arg4[%c1_20, %c0_21, %c0_22] : memref<2x8x128xf32, #tpu.memory_space<vmem>>, vector<1x8x128xf32>
    %42 = vector.shape_cast %41 : vector<1x8x128xf32> to vector<8x128xf32>
    %43 = vector.shape_cast %40 : vector<8x128xf32> to vector<1x8x128xf32>
    tpu.vector_store %arg4[%c1_20, %c0_21, %c0_22], %43 {strides = array<i32>} : memref<2x8x128xf32, #tpu.memory_space<vmem>>, vector<1x8x128xf32>,
    return
  }
  func.func @transform_0(%arg0: i32, %arg1: i32) -> (i32, i32, i32) {
    %c0_i32 = arith.constant 0 : i32
    %c0_i32_0 = arith.constant 0 : i32
    %c0_i32_1 = arith.constant 0 : i32
    return %arg0, %c0_i32, %c0_i32_0 : i32, i32, i32
  }
  func.func @transform_1(%arg0: i32, %arg1: i32) -> (i32, i32, i32) {
    %c0_i32 = arith.constant 0 : i32
    %c0_i32_0 = arith.constant 0 : i32
    %c0_i32_1 = arith.constant 0 : i32
    return %c0_i32, %c0_i32_0, %arg1 : i32, i32, i32
  }
  func.func @transform_2(%arg0: i32, %arg1: i32) -> (i32, i32, i32) {
    %c0_i32 = arith.constant 0 : i32
    %c0_i32_0 = arith.constant 0 : i32
    return %arg0, %c0_i32, %arg1 : i32, i32, i32
  }
}

</mosaic_0001>

<llo_original>
// kernel: tpu_custom_call.1
$region0: #{tpu_custom_call.1}
  #allocation0 [shape = 'u32[]', space=smem, size = 0x4, offset = 0x4, fixed_abs, tag = 'smem constant byte address 0x4 - core index']
  #allocation1 [shape = 'u32[72,128]{1,0:T(1,128)}', space=vmem, size = 0x9000, scoped, tag = 'internal scratch']
  %s0 = inlined_call_operand.vmem [shape: f32[2,8,4], index: 0, kind: input, shape index: {}]
  %s1 = inlined_call_operand.vmem [shape: bf16[3,4,128], index: 1, kind: input, shape index: {}]
  %s2 = inlined_call_operand.hbm [shape: f32[2,8,128], index: 2, kind: output, shape index: {}]
  %s3 = sld [smem:[#allocation0]]
  $region18: #{tpu_custom_call.1} parent=0
    _
  %s5 = ssub.s32 1, %s3
  %s6 = scalar_select 0, %s5, %s3
  $region1: #{tpu_custom_call.1} parent=0
    #allocation2 [shape = 'u8[8192]{0}', space=vmem, size = 0x2000, scoped, tag = 'output window, operand 0, single buffered']
    #allocation3 [shape = 's32[1]{0}', space=sflag, size = 0x4, scoped, tag = 'scoped memory for tpu_custom_call.1']
    %7 = vsyncpa [#allocation3], 0
    // Predicated region
    $region2: #{tpu_custom_call.1} parent=1 // pred_check
      _
    $region3: #{tpu_custom_call.1} parent=1 // pred_check_branch
      %9 = sbr.rel (0) target = $region5
    $region4: #{tpu_custom_call.1} parent=1 // pred_region
      _
    $region5: #{tpu_custom_call.1} parent=1 // pred_fallthru
      _
    // Predicated region
    $region6: #{tpu_custom_call.1} parent=1 // pred_check
      _
    $region7: #{tpu_custom_call.1} parent=1 // pred_check_branch
      %11 = sbr.rel (0) target = $region9
    $region8: #{tpu_custom_call.1} parent=1 // pred_region
      _
    $region9: #{tpu_custom_call.1} parent=1 // pred_fallthru
      _
    %v13 = vld [vmem:[%s1] sm:$0x3]
    %s14 = scalar_lea.vmem %s1, 2
    %v15 = vld [vmem:[%s14] sm:$0x3]
    %s16 = scalar_lea.vmem %s1, 4
    %v17 = vld [vmem:[%s16] sm:$0x3]
    %v18 = vld [vmem:[%s0] sm:$0xff]
    %v20 = vrot.slane %v18, 7
    %vm22 = vcmask 1040384
    %v23 = vsel %vm22, %v20, %v20
    %v24 = vrot.slane %v18, 1
    %vm26 = vcmask 1046528
    %v27 = vsel %vm26, %v24, %v24
    %v28 = vpack.c.bf16 %v18, %v18
    %v29 = vpack.c.bf16 %v23, %v23
    %v30 = vpack.c.bf16 %v27, %v27
    %vm31 = vcmask 31744
    %v33 = vsel %vm31, %v29, 0
    %vm35 = vcmask 1041408
    %v37 = vsel %vm35, %v13, 0
    %39 = vmatpush.bf16.msra.mxu0 0
    %40 = vmatpush.bf16.msra.mxu0 0
    %41 = vmatpush.bf16.msra.mxu0 0
    %42 = vmatpush.bf16.msra.mxu0 0
    %43 = vmatpush.bf16.msra.mxu0 0
    %44 = vmatpush.bf16.msra.mxu0 0
    %45 = vmatpush.bf16.msra.mxu0 0
    %46 = vmatpush.bf16.msra.mxu0 %v37
    %47 = vmatmul.bf16.gmra.mxu0 %v33
    %v48 = vpop.f32.mrf.mxu0
    %v49 = vadd.f32 0.0, %v48
    %v50 = vpop.f32.mrf.mxu0
    %51 = vdwg.mxu0
    %v53 = vsel %vm31, %v28, 0
    %v56 = vsel %vm35, %v15, 0
    %58 = vmatpush.bf16.msra.mxu0 0
    %59 = vmatpush.bf16.msra.mxu0 0
    %60 = vmatpush.bf16.msra.mxu0 0
    %61 = vmatpush.bf16.msra.mxu0 0
    %62 = vmatpush.bf16.msra.mxu0 0
    %63 = vmatpush.bf16.msra.mxu0 0
    %64 = vmatpush.bf16.msra.mxu0 0
    %65 = vmatpush.bf16.msra.mxu0 %v56
    %66 = vmatmul.bf16.gmra.mxu0 %v53
    %v67 = vpop.f32.mrf.mxu0
    %v68 = vadd.f32 %v49, %v67
    %v69 = vpop.f32.mrf.mxu0
    %70 = vdwg.mxu0
    %v72 = vsel %vm31, %v30, 0
    %v75 = vsel %vm35, %v17, 0
    %77 = vmatpush.bf16.msra.mxu0 0
    %78 = vmatpush.bf16.msra.mxu0 0
    %79 = vmatpush.bf16.msra.mxu0 0
    %80 = vmatpush.bf16.msra.mxu0 0
    %81 = vmatpush.bf16.msra.mxu0 0
    %82 = vmatpush.bf16.msra.mxu0 0
    %83 = vmatpush.bf16.msra.mxu0 0
    %84 = vmatpush.bf16.msra.mxu0 %v75
    %85 = vmatmul.bf16.gmra.mxu0 %v72
    %v86 = vpop.f32.mrf.mxu0
    %v87 = vadd.f32 0.0, %v86
    %v88 = vpop.f32.mrf.mxu0
    %89 = vdwg.mxu0
    %v90 = vadd.f32 %v68, %v87
    %91 = vst [vmem:[#allocation2] sm:$0xff] %v90
    %s92 = scalar_lea.vmem %s0, 8
    %v93 = vld [vmem:[%s92] sm:$0xff]
    %v95 = vrot.slane %v93, 7
    %v97 = vsel %vm22, %v95, %v95
    %v98 = vrot.slane %v93, 1
    %v100 = vsel %vm26, %v98, %v98
    %v101 = vpack.c.bf16 %v93, %v93
    %v102 = vpack.c.bf16 %v97, %v97
    %v103 = vpack.c.bf16 %v100, %v100
    %v105 = vsel %vm31, %v102, 0
    %107 = vmatpush.bf16.msra.mxu0 0
    %108 = vmatpush.bf16.msra.mxu0 0
    %109 = vmatpush.bf16.msra.mxu0 0
    %110 = vmatpush.bf16.msra.mxu0 0
    %111 = vmatpush.bf16.msra.mxu0 0
    %112 = vmatpush.bf16.msra.mxu0 0
    %113 = vmatpush.bf16.msra.mxu0 0
    %114 = vmatpush.bf16.msra.mxu0 %v37
    %115 = vmatmul.bf16.gmra.mxu0 %v105
    %v116 = vpop.f32.mrf.mxu0
    %v117 = vadd.f32 0.0, %v116
    %v118 = vpop.f32.mrf.mxu0
    %119 = vdwg.mxu0
    %v121 = vsel %vm31, %v101, 0
    %123 = vmatpush.bf16.msra.mxu0 0
    %124 = vmatpush.bf16.msra.mxu0 0
    %125 = vmatpush.bf16.msra.mxu0 0
    %126 = vmatpush.bf16.msra.mxu0 0
    %127 = vmatpush.bf16.msra.mxu0 0
    %128 = vmatpush.bf16.msra.mxu0 0
    %129 = vmatpush.bf16.msra.mxu0 0
    %130 = vmatpush.bf16.msra.mxu0 %v56
    %131 = vmatmul.bf16.gmra.mxu0 %v121
    %v132 = vpop.f32.mrf.mxu0
    %v133 = vadd.f32 %v117, %v132
    %v134 = vpop.f32.mrf.mxu0
    %135 = vdwg.mxu0
    %v137 = vsel %vm31, %v103, 0
    %139 = vmatpush.bf16.msra.mxu0 0
    %140 = vmatpush.bf16.msra.mxu0 0
    %141 = vmatpush.bf16.msra.mxu0 0
    %142 = vmatpush.bf16.msra.mxu0 0
    %143 = vmatpush.bf16.msra.mxu0 0
    %144 = vmatpush.bf16.msra.mxu0 0
    %145 = vmatpush.bf16.msra.mxu0 0
    %146 = vmatpush.bf16.msra.mxu0 %v75
    %147 = vmatmul.bf16.gmra.mxu0 %v137
    %v148 = vpop.f32.mrf.mxu0
    %v149 = vadd.f32 0.0, %v148
    %v150 = vpop.f32.mrf.mxu0
    %151 = vdwg.mxu0
    %v152 = vadd.f32 %v133, %v149
    %s153 = scalar_lea.vmem [#allocation2], 8
    %154 = vst [vmem:[%s153] sm:$0xff] %v152
    // Predicated region
    $region10: #{tpu_custom_call.1} parent=1 // pred_check
      _
    $region11: #{tpu_custom_call.1} parent=1 // pred_check_branch
      %156 = sbr.rel (0) target = $region13
    $region12: #{tpu_custom_call.1} parent=1 // pred_region
      %158 = vsyncadd [#allocation3], 0
      %s159 = sshll.u32 [#allocation2], 4
      %s160 = int_to_ptr.vmem [resolvable:$true] %s159
      %s161 = sshll.u32 %s2, 4
      %s162 = int_to_ptr.hbm [resolvable:$true] %s161
      %167 = dma.vmem_to_hbm [thread:$0]  %s160, 256, %s162, [#allocation3], 128, 128, 8
    $region13: #{tpu_custom_call.1} parent=1 // pred_fallthru
      _
    // Predicated region
    $region14: #{tpu_custom_call.1} parent=1 // pred_check
      _
    $region15: #{tpu_custom_call.1} parent=1 // pred_check_branch
      %169 = sbr.rel (0) target = $region17
    $region16: #{tpu_custom_call.1} parent=1 // pred_region
      %171 = dma.done [#allocation3], 256
    $region17: #{tpu_custom_call.1} parent=1 // pred_fallthru
      _
    %172 = vsyncpa [#allocation3], 1

</llo_original>
